<compile_context>
chip_gen: v7x
topology: tpu7x:2x2x1
jax: 0.10.0
libtpu: 0.0.40
codegen_flags: <defaults>
</compile_context>

<pallas_src>
import jax
import jax.numpy as jnp
from jax.experimental import pallas as pl
from jax.experimental.pallas import tpu as pltpu

H1 = 256
H2 = 128
OUT_PAD = 128      # fc3 output padded to a full lane width (zero columns)
MAX_TILE_B = 1024  # cap on batch rows per grid step


def _round_up(x, m):
    return ((x + m - 1) // m) * m


def _pick_tile_b(B):
    """Largest batch tile (multiple of 8, <= MAX_TILE_B) that still leaves
    >= 2 grid blocks when possible (both v7x TensorCores)."""
    if B <= 8:
        return 8
    half = _round_up(pl.cdiv(B, 2), 8)
    return min(MAX_TILE_B, half)


def qnn_kernel(x_ref, w1_ref, b1_ref, w2_ref, b2_ref, w3_ref, b3_ref, o_ref):
    # fc1 (BN folded in) + relu.  bf16 MXU operands, f32 accumulation + bias.
    x = x_ref[...].astype(jnp.bfloat16)                          # in-kernel cast
    h1 = jnp.dot(x, w1_ref[...], preferred_element_type=jnp.float32) + b1_ref[...]
    h1 = jnp.maximum(h1.astype(jnp.bfloat16), 0.0)               # relu in bf16
    # dropout1: identity (eval mode)

    # fc2 (BN folded in) + relu
    h2 = jnp.dot(h1, w2_ref[...], preferred_element_type=jnp.float32) + b2_ref[...]
    h2 = jnp.maximum(h2.astype(jnp.bfloat16), 0.0)
    # dropout2: identity (eval mode)

    # fc3 (output padded to 128 lanes; zero columns sliced off in the wrapper)
    out = jnp.dot(h2, w3_ref[...], preferred_element_type=jnp.float32) + b3_ref[...]
    o_ref[...] = out.astype(o_ref.dtype)                         # bf16 writeback


def qnn_forward(x, params, action_size):
    """x: (B, state_size) f32. params: folded params from init_qnn_params
    (weights already bf16, biases f32)."""
    w1, b1, w2, b2, w3, b3 = params
    B, S = x.shape

    tile_b = _pick_tile_b(B)
    n_blocks = pl.cdiv(B, tile_b)
    B_pad = n_blocks * tile_b
    if B_pad != B:  # only for unaligned batches; zero rows sliced off below
        x = jnp.pad(x, ((0, B_pad - B), (0, 0)))

    flops = 2 * B_pad * (S * H1 + H1 * H2 + H2 * OUT_PAD)
    bytes_accessed = (
        B_pad * S * 4                                   # x (f32 in)
        + (S * H1 + H1 * H2 + H2 * OUT_PAD) * 2         # weights (bf16)
        + (H1 + H2 + OUT_PAD) * 4                       # biases (f32)
        + B_pad * OUT_PAD * 2                           # output (bf16)
    )

    const = lambda i: (0, 0)
    out = pl.pallas_call(
        qnn_kernel,
        out_shape=jax.ShapeDtypeStruct((B_pad, OUT_PAD), jnp.bfloat16),
        grid=(n_blocks,),
        in_specs=[
            pl.BlockSpec((tile_b, S), lambda i: (i, 0)),   # x tile (pipelined)
            pl.BlockSpec((S, H1), const),                  # weights/biases resident
            pl.BlockSpec((1, H1), const),
            pl.BlockSpec((H1, H2), const),
            pl.BlockSpec((1, H2), const),
            pl.BlockSpec((H2, OUT_PAD), const),
            pl.BlockSpec((1, OUT_PAD), const),
        ],
        out_specs=pl.BlockSpec((tile_b, OUT_PAD), lambda i: (i, 0)),
        compiler_params=pltpu.CompilerParams(
            dimension_semantics=("parallel",)),
        cost_estimate=pl.CostEstimate(
            flops=flops, transcendentals=0, bytes_accessed=bytes_accessed),
    )(x, w1, b1, w2, b2, w3, b3)

    return out[:B, :action_size]


def init_qnn_params(key, state_size, action_size):
    """Deterministic init mirroring QNN.__init__ (kaiming/xavier weights,
    PyTorch-default uniform biases, identity-init BatchNorm).  Eval-mode BN is
    folded into fc1/fc2, fc3 is padded to 128 output lanes, and weights are
    cast to bf16 ONCE here (biases stay f32)."""
    k1, k2, k3, kb1, kb2, kb3 = jax.random.split(key, 6)
    eps = 1e-5

    # fc1: kaiming_normal_, fan_in, relu -> std = sqrt(2 / fan_in)
    w1 = jax.random.normal(k1, (state_size, H1), jnp.float32) * jnp.sqrt(2.0 / state_size)
    b1 = jax.random.uniform(kb1, (1, H1), jnp.float32,
                            -1.0 / jnp.sqrt(state_size), 1.0 / jnp.sqrt(state_size))
    # fc2: kaiming_normal_, fan_in, relu
    w2 = jax.random.normal(k2, (H1, H2), jnp.float32) * jnp.sqrt(2.0 / H1)
    b2 = jax.random.uniform(kb2, (1, H2), jnp.float32,
                            -1.0 / jnp.sqrt(H1), 1.0 / jnp.sqrt(H1))
    # fc3: xavier_normal_ -> std = sqrt(2 / (fan_in + fan_out))
    w3 = jax.random.normal(k3, (H2, action_size), jnp.float32) * jnp.sqrt(2.0 / (H2 + action_size))
    b3 = jax.random.uniform(kb3, (1, action_size), jnp.float32,
                            -1.0 / jnp.sqrt(H2), 1.0 / jnp.sqrt(H2))

    # BatchNorm1d fresh state (eval): gamma=1, beta=0, mean=0, var=1.
    def bn_fold(n):
        gamma = jnp.ones((1, n), jnp.float32)
        beta = jnp.zeros((1, n), jnp.float32)
        r_mean = jnp.zeros((1, n), jnp.float32)
        r_var = jnp.ones((1, n), jnp.float32)
        scale = gamma / jnp.sqrt(r_var + eps)
        shift = beta - r_mean * scale
        return scale, shift

    s1, t1 = bn_fold(H1)
    s2, t2 = bn_fold(H2)

    # Fold BN into the linears (in f32): y = (xW + b)*s + t == x(W*s) + (b*s + t)
    w1f = (w1 * s1).astype(jnp.bfloat16)
    b1f = b1 * s1 + t1
    w2f = (w2 * s2).astype(jnp.bfloat16)
    b2f = b2 * s2 + t2

    # Pad fc3 to 128 output lanes (zero columns) for lane-dense MXU/stores.
    w3p = jnp.zeros((H2, OUT_PAD), jnp.float32).at[:, :action_size].set(w3).astype(jnp.bfloat16)
    b3p = jnp.zeros((1, OUT_PAD), jnp.float32).at[:, :action_size].set(b3)

    return (w1f, b1f, w2f, b2f, w3p, b3p)


def qnn_reference(x, params, action_size):
    """Pure-JAX reference using the same bf16-operand / f32-accumulate math."""
    w1, b1, w2, b2, w3, b3 = params
    xb = x.astype(jnp.bfloat16)
    h1 = jnp.maximum(jnp.dot(xb, w1, preferred_element_type=jnp.float32) + b1, 0.0)
    h2 = jnp.maximum(jnp.dot(h1.astype(jnp.bfloat16), w2,
                             preferred_element_type=jnp.float32) + b2, 0.0)
    out = jnp.dot(h2.astype(jnp.bfloat16), w3,
                  preferred_element_type=jnp.float32) + b3
    return out[:, :action_size].astype(jnp.bfloat16)


if __name__ == "__main__":
    key = jax.random.PRNGKey(0)
    k_params, k_x = jax.random.split(key)

    batch = 256          # two 128-row grid blocks (both TCs on v7x)
    state_size = 16
    action_size = 8

    params = init_qnn_params(k_params, state_size, action_size)
    x = jax.random.normal(k_x, (batch, state_size), jnp.float32)

    out = qnn_forward(x, params, action_size)
    out = jax.block_until_ready(out)

    ref = qnn_reference(x, params, action_size)
    assert out.shape == (batch, action_size)
    assert jnp.allclose(out.astype(jnp.float32), ref.astype(jnp.float32),
                        atol=2e-2, rtol=2e-2), "mismatch vs JAX reference"

    print("KERNEL_OK")
</pallas_src>

<mosaic_0001>
module attributes {stable_mosaic.version = 11 : i64} {
  func.func @qnn_kernel(%arg0: i32, %arg1: memref<128x16xf32, #tpu.memory_space<vmem>>, %arg2: memref<16x256xbf16, #tpu.memory_space<vmem>>, %arg3: memref<1x256xf32, #tpu.memory_space<vmem>>, %arg4: memref<256x128xbf16, #tpu.memory_space<vmem>>, %arg5: memref<1x128xf32, #tpu.memory_space<vmem>>, %arg6: memref<128x128xbf16, #tpu.memory_space<vmem>>, %arg7: memref<1x128xf32, #tpu.memory_space<vmem>>, %arg8: memref<128x128xbf16, #tpu.memory_space<vmem>>) attributes {dimension_semantics = [#tpu.dimension_semantics<parallel>], iteration_bounds = array<i64: 2>, scalar_prefetch = 0 : i64, scratch_operands = 0 : i64, tpu.core_type = #tpu.core_type<tc>, window_params = [{transform_indices = @transform_0, window_bounds = array<i64: 128, 16>}, {pipeline_mode = #tpu.pipeline_mode<synchronous>, transform_indices = @transform_1, window_bounds = array<i64: 16, 256>}, {pipeline_mode = #tpu.pipeline_mode<synchronous>, transform_indices = @transform_2, window_bounds = array<i64: 1, 256>}, {pipeline_mode = #tpu.pipeline_mode<synchronous>, transform_indices = @transform_3, window_bounds = array<i64: 256, 128>}, {pipeline_mode = #tpu.pipeline_mode<synchronous>, transform_indices = @transform_4, window_bounds = array<i64: 1, 128>}, {pipeline_mode = #tpu.pipeline_mode<synchronous>, transform_indices = @transform_5, window_bounds = array<i64: 128, 128>}, {pipeline_mode = #tpu.pipeline_mode<synchronous>, transform_indices = @transform_6, window_bounds = array<i64: 1, 128>}, {transform_indices = @transform_7, window_bounds = array<i64: 128, 128>}]} {
    %c0 = arith.constant 0 : index
    %c0_0 = arith.constant 0 : index
    %0 = vector.load %arg1[%c0, %c0_0] : memref<128x16xf32, #tpu.memory_space<vmem>>, vector<128x16xf32>
    %1 = arith.truncf %0 : vector<128x16xf32> to vector<128x16xbf16>
    %c0_1 = arith.constant 0 : index
    %c0_2 = arith.constant 0 : index
    %2 = vector.load %arg2[%c0_1, %c0_2] : memref<16x256xbf16, #tpu.memory_space<vmem>>, vector<16x256xbf16>
    %cst = arith.constant dense<0.000000e+00> : vector<128x256xf32>
    %3 = tpu.matmul %1, %2, %cst {dimension_numbers = #tpu.dot_dimension_numbers<[1], [0], [0], [1], [0, 0, 1, 1], [], []>} : vector<128x16xbf16>, vector<16x256xbf16>, vector<128x256xf32> -> vector<128x256xf32>
    %c0_3 = arith.constant 0 : index
    %c0_4 = arith.constant 0 : index
    %4 = vector.load %arg3[%c0_3, %c0_4] : memref<1x256xf32, #tpu.memory_space<vmem>>, vector<1x256xf32>
    %5 = vector.broadcast %4 : vector<1x256xf32> to vector<128x256xf32>
    %6 = arith.addf %3, %5 : vector<128x256xf32>
    %7 = arith.truncf %6 : vector<128x256xf32> to vector<128x256xbf16>
    %cst_5 = arith.constant 0.000000e+00 : bf16
    %8 = vector.broadcast %cst_5 : bf16 to vector<128x256xbf16>
    %9 = arith.maximumf %7, %8 : vector<128x256xbf16>
    %c0_6 = arith.constant 0 : index
    %c0_7 = arith.constant 0 : index
    %10 = vector.load %arg4[%c0_6, %c0_7] : memref<256x128xbf16, #tpu.memory_space<vmem>>, vector<256x128xbf16>
    %cst_8 = arith.constant dense<0.000000e+00> : vector<128x128xf32>
    %11 = tpu.matmul %9, %10, %cst_8 {dimension_numbers = #tpu.dot_dimension_numbers<[1], [0], [0], [1], [0, 0, 1, 1], [], []>} : vector<128x256xbf16>, vector<256x128xbf16>, vector<128x128xf32> -> vector<128x128xf32>
    %c0_9 = arith.constant 0 : index
    %c0_10 = arith.constant 0 : index
    %12 = vector.load %arg5[%c0_9, %c0_10] : memref<1x128xf32, #tpu.memory_space<vmem>>, vector<1x128xf32>
    %13 = vector.broadcast %12 : vector<1x128xf32> to vector<128x128xf32>
    %14 = arith.addf %11, %13 : vector<128x128xf32>
    %15 = arith.truncf %14 : vector<128x128xf32> to vector<128x128xbf16>
    %cst_11 = arith.constant 0.000000e+00 : bf16
    %16 = vector.broadcast %cst_11 : bf16 to vector<128x128xbf16>
    %17 = arith.maximumf %15, %16 : vector<128x128xbf16>
    %c0_12 = arith.constant 0 : index
    %c0_13 = arith.constant 0 : index
    %18 = vector.load %arg6[%c0_12, %c0_13] : memref<128x128xbf16, #tpu.memory_space<vmem>>, vector<128x128xbf16>
    %cst_14 = arith.constant dense<0.000000e+00> : vector<128x128xf32>
    %19 = tpu.matmul %17, %18, %cst_14 {dimension_numbers = #tpu.dot_dimension_numbers<[1], [0], [0], [1], [0, 0, 1, 1], [], []>} : vector<128x128xbf16>, vector<128x128xbf16>, vector<128x128xf32> -> vector<128x128xf32>
    %c0_15 = arith.constant 0 : index
    %c0_16 = arith.constant 0 : index
    %20 = vector.load %arg7[%c0_15, %c0_16] : memref<1x128xf32, #tpu.memory_space<vmem>>, vector<1x128xf32>
    %21 = vector.broadcast %20 : vector<1x128xf32> to vector<128x128xf32>
    %22 = arith.addf %19, %21 : vector<128x128xf32>
    %23 = arith.truncf %22 : vector<128x128xf32> to vector<128x128xbf16>
    %c0_17 = arith.constant 0 : index
    %c0_18 = arith.constant 0 : index
    %24 = vector.load %arg8[%c0_17, %c0_18] : memref<128x128xbf16, #tpu.memory_space<vmem>>, vector<128x128xbf16>
    tpu.vector_store %arg8[%c0_17, %c0_18], %23 {strides = array<i32>} : memref<128x128xbf16, #tpu.memory_space<vmem>>, vector<128x128xbf16>,
    return
  }
  func.func @transform_0(%arg0: i32) -> (i32, i32) {
    %c0_i32 = arith.constant 0 : i32
    %c0_i32_0 = arith.constant 0 : i32
    return %arg0, %c0_i32 : i32, i32
  }
  func.func @transform_1(%arg0: i32) -> (i32, i32) {
    %c0_i32 = arith.constant 0 : i32
    %c0_i32_0 = arith.constant 0 : i32
    %c0_i32_1 = arith.constant 0 : i32
    return %c0_i32, %c0_i32_0 : i32, i32
  }
  func.func @transform_2(%arg0: i32) -> (i32, i32) {
    %c0_i32 = arith.constant 0 : i32
    %c0_i32_0 = arith.constant 0 : i32
    %c0_i32_1 = arith.constant 0 : i32
    return %c0_i32, %c0_i32_0 : i32, i32
  }
  func.func @transform_3(%arg0: i32) -> (i32, i32) {
    %c0_i32 = arith.constant 0 : i32
    %c0_i32_0 = arith.constant 0 : i32
    %c0_i32_1 = arith.constant 0 : i32
    return %c0_i32, %c0_i32_0 : i32, i32
  }
  func.func @transform_4(%arg0: i32) -> (i32, i32) {
    %c0_i32 = arith.constant 0 : i32
    %c0_i32_0 = arith.constant 0 : i32
    %c0_i32_1 = arith.constant 0 : i32
    return %c0_i32, %c0_i32_0 : i32, i32
  }
  func.func @transform_5(%arg0: i32) -> (i32, i32) {
    %c0_i32 = arith.constant 0 : i32
    %c0_i32_0 = arith.constant 0 : i32
    %c0_i32_1 = arith.constant 0 : i32
    return %c0_i32, %c0_i32_0 : i32, i32
  }
  func.func @transform_6(%arg0: i32) -> (i32, i32) {
    %c0_i32 = arith.constant 0 : i32
    %c0_i32_0 = arith.constant 0 : i32
    %c0_i32_1 = arith.constant 0 : i32
    return %c0_i32, %c0_i32_0 : i32, i32
  }
  func.func @transform_7(%arg0: i32) -> (i32, i32) {
    %c0_i32 = arith.constant 0 : i32
    %c0_i32_0 = arith.constant 0 : i32
    return %arg0, %c0_i32 : i32, i32
  }
}

</mosaic_0001>

<llo_original>
// kernel: tpu_custom_call.1
$region0: #{tpu_custom_call.1}
  #allocation0 [shape = 'u32[]', space=smem, size = 0x4, offset = 0x4, fixed_abs, tag = 'smem constant byte address 0x4 - core index']
  #allocation1 [shape = 'u32[144,128]{1,0:T(1,128)}', space=vmem, size = 0x12000, scoped, tag = 'internal scratch']
  %s0 = inlined_call_operand.vmem [shape: f32[256,16], index: 0, kind: input, shape index: {}]
  %s1 = inlined_call_operand.vmem [shape: bf16[16,256], index: 1, kind: input, shape index: {}]
  %s2 = inlined_call_operand.vmem [shape: f32[1,256], index: 2, kind: input, shape index: {}]
  %s3 = inlined_call_operand.vmem [shape: bf16[256,128], index: 3, kind: input, shape index: {}]
  %s4 = inlined_call_operand.vmem [shape: f32[1,128], index: 4, kind: input, shape index: {}]
  %s5 = inlined_call_operand.vmem [shape: bf16[128,128], index: 5, kind: input, shape index: {}]
  %s6 = inlined_call_operand.vmem [shape: f32[1,128], index: 6, kind: input, shape index: {}]
  %s7 = inlined_call_operand.hbm [shape: bf16[256,128], index: 7, kind: output, shape index: {}]
  %s8 = sld [smem:[#allocation0]]
  $region61: #{tpu_custom_call.1} parent=0
    _
  %s10 = ssub.s32 1, %s8
  %s11 = scalar_select 0, %s10, %s8
  $region1: #{tpu_custom_call.1} parent=0
    #allocation2 [shape = 'u8[65536]{0}', space=vmem, size = 0x10000, scoped, tag = 'output window, operand 0']
    #allocation3 [shape = 's32[2]{0}', space=sflag, size = 0x8, scoped, tag = 'scoped memory for tpu_custom_call.1']
    %12 = vsyncpa [#allocation3], 0
    %s13 = scalar_lea.sflag [#allocation3], 1
    %14 = vsyncpa %s13, 0
    loop: start=0, step=1, limit=4
    $region2: #{tpu_custom_call.1} parent=1 // loop_pre_header
      _
    $region3: #{tpu_custom_call.1} parent=1 // loop_header
      %s16 = sphi 0, %s20
      %p17 = scmp.ge.s32.totalorder %s16, 4
      %s26 = sphi 0, %s28
      %s29 = sphi 0, %s26
      %s30 = sphi 0, %s29
      %s46 = sphi 0, %s30
      %s50 = sphi 0, %s50
      %s52 = sphi 0, %s50
      %s53 = sphi 0, %s52
      %s67 = sphi 0, %s53
      %s71 = sphi 0, %s71
      %s73 = sphi 0, %s71
      %s74 = sphi 0, %s73
      %s88 = sphi 0, %s74
      %s92 = sphi 0, %s92
      %s94 = sphi 0, %s92
      %s95 = sphi 0, %s94
      %s109 = sphi 0, %s95
      %s113 = sphi 0, %s113
      %s115 = sphi 0, %s113
      %s116 = sphi 0, %s115
      %s130 = sphi 0, %s116
      %s134 = sphi 0, %s134
      %s136 = sphi 0, %s134
      %s137 = sphi 0, %s136
      %s151 = sphi 0, %s137
      %s155 = sphi 0, %s155
      %s157 = sphi 0, %s155
      %s158 = sphi 0, %s157
      %s172 = sphi 0, %s158
      %s178 = sphi 0, %s180
      %s181 = sphi 0, %s178
      %s182 = sphi 0, %s181
      %s198 = sphi 0, %s182
    $region4: #{tpu_custom_call.1} parent=1 // loop_header_branch
      %19 = sbr.rel (%p17) target = $region8
    $region5: #{tpu_custom_call.1} parent=1 // loop_body
      %s21 = ssub.s32 %s16, 1
      %s22 = ssub.s32 %s16, 2
      %s23 = sadd.s32 %s16, 1
      %s24 = ssub.s32 %s16, %s23
      %p25 = scmp.eq.s32.totalorder %s24, 0
      %s27 = sadd.s32 %s26, 1
      %s28 = scalar_select %p25, %s26, %s27
      %p31 = pneg %p25
      %p32 = scmp.eq.s32.totalorder %s16, 1
      %p33 = por %p31, %p32
      %p34 = scmp.ne.s32.totalorder %s26, %s29
      %p35 = scmp.eq.s32.totalorder %s16, 0
      %p36 = por %p34, %p35
      %p37 = scmp.ne.s32.totalorder %s26, %s29
      %p38 = scmp.eq.s32.totalorder %s21, 1
      %p39 = por %p37, %p38
      %p40 = scmp.ne.s32.totalorder %s29, %s30
      %p41 = scmp.eq.s32.totalorder %s21, 0
      %p42 = por %p40, %p41
      %p43 = scmp.ne.s32.totalorder %s29, %s30
      %p44 = scmp.eq.s32.totalorder %s22, 1
      %p45 = por %p43, %p44
      %p47 = scmp.ne.s32.totalorder %s30, %s46
      %p48 = scmp.eq.s32.totalorder %s22, 0
      %p49 = por %p47, %p48
      %s51 = sadd.s32 %s50, 1
      %p54 = scmp.eq.s32.totalorder %s16, 1
      %p55 = scmp.ne.s32.totalorder %s50, %s52
      %p56 = scmp.eq.s32.totalorder %s16, 0
      %p57 = por %p55, %p56
      %p58 = scmp.ne.s32.totalorder %s50, %s52
      %p59 = scmp.eq.s32.totalorder %s21, 1
      %p60 = por %p58, %p59
      %p61 = scmp.ne.s32.totalorder %s52, %s53
      %p62 = scmp.eq.s32.totalorder %s21, 0
      %p63 = por %p61, %p62
      %p64 = scmp.ne.s32.totalorder %s52, %s53
      %p65 = scmp.eq.s32.totalorder %s22, 1
      %p66 = por %p64, %p65
      %p68 = scmp.ne.s32.totalorder %s53, %s67
      %p69 = scmp.eq.s32.totalorder %s22, 0
      %p70 = por %p68, %p69
      %s72 = sadd.s32 %s71, 1
      %p75 = scmp.eq.s32.totalorder %s16, 1
      %p76 = scmp.ne.s32.totalorder %s71, %s73
      %p77 = scmp.eq.s32.totalorder %s16, 0
      %p78 = por %p76, %p77
      %p79 = scmp.ne.s32.totalorder %s71, %s73
      %p80 = scmp.eq.s32.totalorder %s21, 1
      %p81 = por %p79, %p80
      %p82 = scmp.ne.s32.totalorder %s73, %s74
      %p83 = scmp.eq.s32.totalorder %s21, 0
      %p84 = por %p82, %p83
      %p85 = scmp.ne.s32.totalorder %s73, %s74
      %p86 = scmp.eq.s32.totalorder %s22, 1
      %p87 = por %p85, %p86
      %p89 = scmp.ne.s32.totalorder %s74, %s88
      %p90 = scmp.eq.s32.totalorder %s22, 0
      %p91 = por %p89, %p90
      %s93 = sadd.s32 %s92, 1
      %p96 = scmp.eq.s32.totalorder %s16, 1
      %p97 = scmp.ne.s32.totalorder %s92, %s94
      %p98 = scmp.eq.s32.totalorder %s16, 0
      %p99 = por %p97, %p98
      %p100 = scmp.ne.s32.totalorder %s92, %s94
      %p101 = scmp.eq.s32.totalorder %s21, 1
      %p102 = por %p100, %p101
      %p103 = scmp.ne.s32.totalorder %s94, %s95
      %p104 = scmp.eq.s32.totalorder %s21, 0
      %p105 = por %p103, %p104
      %p106 = scmp.ne.s32.totalorder %s94, %s95
      %p107 = scmp.eq.s32.totalorder %s22, 1
      %p108 = por %p106, %p107
      %p110 = scmp.ne.s32.totalorder %s95, %s109
      %p111 = scmp.eq.s32.totalorder %s22, 0
      %p112 = por %p110, %p111
      %s114 = sadd.s32 %s113, 1
      %p117 = scmp.eq.s32.totalorder %s16, 1
      %p118 = scmp.ne.s32.totalorder %s113, %s115
      %p119 = scmp.eq.s32.totalorder %s16, 0
      %p120 = por %p118, %p119
      %p121 = scmp.ne.s32.totalorder %s113, %s115
      %p122 = scmp.eq.s32.totalorder %s21, 1
      %p123 = por %p121, %p122
      %p124 = scmp.ne.s32.totalorder %s115, %s116
      %p125 = scmp.eq.s32.totalorder %s21, 0
      %p126 = por %p124, %p125
      %p127 = scmp.ne.s32.totalorder %s115, %s116
      %p128 = scmp.eq.s32.totalorder %s22, 1
      %p129 = por %p127, %p128
      %p131 = scmp.ne.s32.totalorder %s116, %s130
      %p132 = scmp.eq.s32.totalorder %s22, 0
      %p133 = por %p131, %p132
      %s135 = sadd.s32 %s134, 1
      %p138 = scmp.eq.s32.totalorder %s16, 1
      %p139 = scmp.ne.s32.totalorder %s134, %s136
      %p140 = scmp.eq.s32.totalorder %s16, 0
      %p141 = por %p139, %p140
      %p142 = scmp.ne.s32.totalorder %s134, %s136
      %p143 = scmp.eq.s32.totalorder %s21, 1
      %p144 = por %p142, %p143
      %p145 = scmp.ne.s32.totalorder %s136, %s137
      %p146 = scmp.eq.s32.totalorder %s21, 0
      %p147 = por %p145, %p146
      %p148 = scmp.ne.s32.totalorder %s136, %s137
      %p149 = scmp.eq.s32.totalorder %s22, 1
      %p150 = por %p148, %p149
      %p152 = scmp.ne.s32.totalorder %s137, %s151
      %p153 = scmp.eq.s32.totalorder %s22, 0
      %p154 = por %p152, %p153
      %s156 = sadd.s32 %s155, 1
      %p159 = scmp.eq.s32.totalorder %s16, 1
      %p160 = scmp.ne.s32.totalorder %s155, %s157
      %p161 = scmp.eq.s32.totalorder %s16, 0
      %p162 = por %p160, %p161
      %p163 = scmp.ne.s32.totalorder %s155, %s157
      %p164 = scmp.eq.s32.totalorder %s21, 1
      %p165 = por %p163, %p164
      %p166 = scmp.ne.s32.totalorder %s157, %s158
      %p167 = scmp.eq.s32.totalorder %s21, 0
      %p168 = por %p166, %p167
      %p169 = scmp.ne.s32.totalorder %s157, %s158
      %p170 = scmp.eq.s32.totalorder %s22, 1
      %p171 = por %p169, %p170
      %p173 = scmp.ne.s32.totalorder %s158, %s172
      %p174 = scmp.eq.s32.totalorder %s22, 0
      %p175 = por %p173, %p174
      %s176 = ssub.s32 %s16, %s23
      %p177 = scmp.eq.s32.totalorder %s176, 0
      %s179 = sadd.s32 %s178, 1
      %s180 = scalar_select %p177, %s178, %s179
      %p183 = pneg %p177
      %p184 = scmp.eq.s32.totalorder %s16, 1
      %p185 = por %p183, %p184
      %p186 = scmp.ne.s32.totalorder %s178, %s181
      %p187 = scmp.eq.s32.totalorder %s16, 0
      %p188 = por %p186, %p187
      %p189 = scmp.ne.s32.totalorder %s178, %s181
      %p190 = scmp.eq.s32.totalorder %s21, 1
      %p191 = por %p189, %p190
      %p192 = scmp.ne.s32.totalorder %s181, %s182
      %p193 = scmp.eq.s32.totalorder %s21, 0
      %p194 = por %p192, %p193
      %p195 = scmp.ne.s32.totalorder %s181, %s182
      %p196 = scmp.eq.s32.totalorder %s22, 1
      %p197 = por %p195, %p196
      %p199 = scmp.ne.s32.totalorder %s182, %s198
      %p200 = scmp.eq.s32.totalorder %s22, 0
      %p201 = por %p199, %p200
      %p202 = scmp.le.s32.totalorder 1, %s16
      %p203 = scmp.lt.s32.totalorder %s16, 3
      %p204 = pnand %p202, %p203
      %p205 = pneg %p204
      // Predicated region
      $region9: #{tpu_custom_call.1} parent=5 // pred_check
        _
      $region10: #{tpu_custom_call.1} parent=5 // pred_check_branch
        %207 = sbr.rel (%p204) target = $region12
      $region11: #{tpu_custom_call.1} parent=5 // pred_region
        %s208 = ssub.s32 %s16, 1
        // Predicated region
        $region13: #{tpu_custom_call.1} parent=11 // pred_check
          %p209 = pneg %p63
        $region14: #{tpu_custom_call.1} parent=11 // pred_check_branch
          %211 = sbr.rel (%p209) target = $region16
        $region15: #{tpu_custom_call.1} parent=11 // pred_region
          _
        $region16: #{tpu_custom_call.1} parent=11 // pred_fallthru
          _
        // Predicated region
        $region17: #{tpu_custom_call.1} parent=11 // pred_check
          %p212 = pneg %p84
        $region18: #{tpu_custom_call.1} parent=11 // pred_check_branch
          %214 = sbr.rel (%p212) target = $region20
        $region19: #{tpu_custom_call.1} parent=11 // pred_region
          _
        $region20: #{tpu_custom_call.1} parent=11 // pred_fallthru
          _
        // Predicated region
        $region21: #{tpu_custom_call.1} parent=11 // pred_check
          %p215 = pneg %p105
        $region22: #{tpu_custom_call.1} parent=11 // pred_check_branch
          %217 = sbr.rel (%p215) target = $region24
        $region23: #{tpu_custom_call.1} parent=11 // pred_region
          _
        $region24: #{tpu_custom_call.1} parent=11 // pred_fallthru
          _
        // Predicated region
        $region25: #{tpu_custom_call.1} parent=11 // pred_check
          %p218 = pneg %p126
        $region26: #{tpu_custom_call.1} parent=11 // pred_check_branch
          %220 = sbr.rel (%p218) target = $region28
        $region27: #{tpu_custom_call.1} parent=11 // pred_region
          _
        $region28: #{tpu_custom_call.1} parent=11 // pred_fallthru
          _
        // Predicated region
        $region29: #{tpu_custom_call.1} parent=11 // pred_check
          %p221 = pneg %p147
        $region30: #{tpu_custom_call.1} parent=11 // pred_check_branch
          %223 = sbr.rel (%p221) target = $region32
        $region31: #{tpu_custom_call.1} parent=11 // pred_region
          _
        $region32: #{tpu_custom_call.1} parent=11 // pred_fallthru
          _
        // Predicated region
        $region33: #{tpu_custom_call.1} parent=11 // pred_check
          %p224 = pneg %p168
        $region34: #{tpu_custom_call.1} parent=11 // pred_check_branch
          %226 = sbr.rel (%p224) target = $region36
        $region35: #{tpu_custom_call.1} parent=11 // pred_region
          _
        $region36: #{tpu_custom_call.1} parent=11 // pred_fallthru
          _
      $region12: #{tpu_custom_call.1} parent=5 // pred_fallthru
        _
      %p227 = scmp.lt.s32.totalorder %s16, 2
      // Predicated region
      $region37: #{tpu_custom_call.1} parent=5 // pred_check
        %p228 = pneg %p227
      $region38: #{tpu_custom_call.1} parent=5 // pred_check_branch
        %230 = sbr.rel (%p228) target = $region40
      $region39: #{tpu_custom_call.1} parent=5 // pred_region
        // Predicated region
        $region41: #{tpu_custom_call.1} parent=39 // pred_check
          %p231 = pneg %p36
        $region42: #{tpu_custom_call.1} parent=39 // pred_check_branch
          %233 = sbr.rel (%p231) target = $region44
        $region43: #{tpu_custom_call.1} parent=39 // pred_region
          %s234 = smul.u32 16, %s16
          %p235 = scmp.lt.s32.totalorder %s234, 31
          %s236 = scalar_select %p235, %s234, 31
          %s237 = smul.addr %s236, 8
          %s238 = scalar_lea.vmem %s0, %s237
          %s239 = smul.u32 16, %s16
        $region44: #{tpu_custom_call.1} parent=39 // pred_fallthru
          _
      $region40: #{tpu_custom_call.1} parent=5 // pred_fallthru
        _
      %p240 = scmp.le.s32.totalorder 1, %s16
      %p241 = scmp.lt.s32.totalorder %s16, 3
      %p242 = pnand %p240, %p241
      %p243 = pneg %p242
      // Predicated region
      $region45: #{tpu_custom_call.1} parent=5 // pred_check
        _
      $region46: #{tpu_custom_call.1} parent=5 // pred_check_branch
        %245 = sbr.rel (%p242) target = $region48
      $region47: #{tpu_custom_call.1} parent=5 // pred_region
        %s246 = ssub.s32 %s16, 1
        %s247 = smul.u32 16, %s21
        %p248 = scmp.lt.s32.totalorder %s247, 31
        %s249 = scalar_select %p248, %s247, 31
        %s250 = smul.addr %s249, 8
        %s251 = scalar_lea.vmem %s0, %s250
        %p252 = pneg %p42
        %p253 = pneg %p39
        %p254 = pneg %p63
        %p255 = pneg %p60
        %p256 = pneg %p84
        %p257 = pneg %p81
        %p258 = pneg %p105
        %p259 = pneg %p102
        %p260 = pneg %p126
        %p261 = pneg %p123
        %p262 = pneg %p147
        %p263 = pneg %p144
        %p264 = pneg %p168
        %p265 = pneg %p165
        %p266 = pneg %p194
        %p267 = pneg %p191
        %s268 = sand.u32 %s181, 1
        %s269 = scalar_lea.sflag [#allocation3], %s268
        %s270 = sand.u32 %s181, 1
        %s271 = smul.addr %s270, 64
        %s272 = scalar_lea.vmem [#allocation2], %s271
        %s273 = smul.u32 16, %s21
        %p274 = scmp.lt.s32.totalorder %s273, 31
        %s275 = scalar_select %p274, %s273, 31
        %s276 = smul.addr %s275, 8
        %s277 = scalar_lea.vmem %s0, %s276
        %s278 = smul.u32 16, %s21
        %s279 = smul.u32 16, %s21
        %v281 = vld [vmem:[%s277] sm:$0xff]
        %v282 = vld [vmem:[%s277 + $0x8] sm:$0xff]
        %v283 = vld [vmem:[%s277 + $0x10] sm:$0xff]
        %v284 = vld [vmem:[%s277 + $0x18] sm:$0xff]
        %v285 = vld [vmem:[%s277 + $0x20] sm:$0xff]
        %v286 = vld [vmem:[%s277 + $0x28] sm:$0xff]
        %v287 = vld [vmem:[%s277 + $0x30] sm:$0xff]
        %v288 = vld [vmem:[%s277 + $0x38] sm:$0xff]
        %v289 = vld [vmem:[%s277 + $0x40] sm:$0xff]
        %v290 = vld [vmem:[%s277 + $0x48] sm:$0xff]
        %v291 = vld [vmem:[%s277 + $0x50] sm:$0xff]
        %v292 = vld [vmem:[%s277 + $0x58] sm:$0xff]
        %v293 = vld [vmem:[%s277 + $0x60] sm:$0xff]
        %v294 = vld [vmem:[%s277 + $0x68] sm:$0xff]
        %v295 = vld [vmem:[%s277 + $0x70] sm:$0xff]
        %v296 = vld [vmem:[%s277 + $0x78] sm:$0xff]
        %v297 = vpack.c.bf16 %v282, %v281
        %v298 = vpack.c.bf16 %v284, %v283
        %v299 = vpack.c.bf16 %v286, %v285
        %v300 = vpack.c.bf16 %v288, %v287
        %v301 = vpack.c.bf16 %v290, %v289
        %v302 = vpack.c.bf16 %v292, %v291
        %v303 = vpack.c.bf16 %v294, %v293
        %v304 = vpack.c.bf16 %v296, %v295
        %v305 = vld [vmem:[%s1] sm:$0xff]
        %v306 = vld [vmem:[%s1 + $0x8] sm:$0xff]
        %v307 = vld [vmem:[%s2] sm:$0x3]
        %v309 = vlaneseq
        %v310 = vshrl.u32 %v309, 7
        %v311 = vsub.s32 0, %v310
        %v312 = vrot.slane %v307, %v311
        %v313 = vlaneseq
        %v314 = vshrl.u32 %v313, 7
        %v315 = vsub.s32 1, %v314
        %v316 = vrot.slane %v307, %v315
        %v321 = vunpack.c.l.b16 %v305
        %v322 = vunpack.c.h.b16 %v305
        %v323 = vunpack.c.l.b16 %v306
        %v324 = vunpack.c.h.b16 %v306
        %v325 = vpack.c.b16 %v323, %v321
        %v326 = vpack.c.b16 %v324, %v322
        %vm329 = vcmask 130048
        %v331 = vsel %vm329, %v297, 0
        %v334 = vsel %vm329, %v298, 0
        %v337 = vsel %vm329, %v299, 0
        %v340 = vsel %vm329, %v300, 0
        %v343 = vsel %vm329, %v301, 0
        %v346 = vsel %vm329, %v302, 0
        %v349 = vsel %vm329, %v303, 0
        %v352 = vsel %vm329, %v304, 0
        %354 = vmatprep.subr.bf16.mxu0 %v326
        %355 = vmatpush1.bf16.msra.mxu0 %v325
        %356 = vmatprep.subr.bf16.mxu0 0
        %357 = vmatpush1.bf16.msra.mxu0 0
        %358 = vmatprep.subr.bf16.mxu0 0
        %359 = vmatpush1.bf16.msra.mxu0 0
        %360 = vmatprep.subr.bf16.mxu0 0
        %361 = vmatpush1.bf16.msra.mxu0 0
        %362 = vmatprep.subr.bf16.mxu0 0
        %363 = vmatpush1.bf16.msra.mxu0 0
        %364 = vmatprep.subr.bf16.mxu0 0
        %365 = vmatpush1.bf16.msra.mxu0 0
        %366 = vmatprep.subr.bf16.mxu0 0
        %367 = vmatpush1.bf16.msra.mxu0 0
        %368 = vmatprep.subr.bf16.mxu0 0
        %369 = vmatpush1.bf16.msra.mxu0 0
        %370 = vmatprep.subr.bf16.mxu0 0
        %371 = vmatpush1.bf16.msra.mxu0 0
        %372 = vmatprep.subr.bf16.mxu0 0
        %373 = vmatpush1.bf16.msra.mxu0 0
        %374 = vmatprep.subr.bf16.mxu0 0
        %375 = vmatpush1.bf16.msra.mxu0 0
        %376 = vmatprep.subr.bf16.mxu0 0
        %377 = vmatpush1.bf16.msra.mxu0 0
        %378 = vmatprep.subr.bf16.mxu0 0
        %379 = vmatpush1.bf16.msra.mxu0 0
        %380 = vmatprep.subr.bf16.mxu0 0
        %381 = vmatpush1.bf16.msra.mxu0 0
        %382 = vmatprep.subr.bf16.mxu0 0
        %383 = vmatpush1.bf16.msra.mxu0 0
        %384 = vmatprep.subr.bf16.mxu0 0
        %385 = vmatpush1.bf16.msra.mxu0 0
        %386 = vmatprep.mubr.bf16.mxu0 0
        %387 = vmatmul.mubr.bf16.gmra.mrb[0].mxu0 %v331
        %v388 = vpop.f32.mrb[0].mxu0
        %v389 = vadd.f32 %v312, %v388
        %v390 = vpop.f32.mrb[0].mxu0
        %v391 = vadd.f32 %v316, %v390
        %v392 = vpop.f32.mrb[0].mxu0
        %v393 = vadd.f32 %v312, %v392
        %v394 = vpop.f32.mrb[0].mxu0
        %v395 = vadd.f32 %v316, %v394
        %396 = vmatprep.mubr.bf16.mxu0 0
        %397 = vmatmul.mubr.bf16.gmra.mrb[0].mxu0 %v334
        %v398 = vpop.f32.mrb[0].mxu0
        %v399 = vadd.f32 %v312, %v398
        %v400 = vpop.f32.mrb[0].mxu0
        %v401 = vadd.f32 %v316, %v400
        %v402 = vpop.f32.mrb[0].mxu0
        %v403 = vadd.f32 %v312, %v402
        %v404 = vpop.f32.mrb[0].mxu0
        %v405 = vadd.f32 %v316, %v404
        %406 = vmatprep.mubr.bf16.mxu0 0
        %407 = vmatmul.mubr.bf16.gmra.mrb[0].mxu0 %v337
        %v408 = vpop.f32.mrb[0].mxu0
        %v409 = vadd.f32 %v312, %v408
        %v410 = vpop.f32.mrb[0].mxu0
        %v411 = vadd.f32 %v316, %v410
        %v412 = vpop.f32.mrb[0].mxu0
        %v413 = vadd.f32 %v312, %v412
        %v414 = vpop.f32.mrb[0].mxu0
        %v415 = vadd.f32 %v316, %v414
        %416 = vmatprep.mubr.bf16.mxu0 0
        %417 = vmatmul.mubr.bf16.gmra.mrb[0].mxu0 %v340
        %v418 = vpop.f32.mrb[0].mxu0
        %v419 = vadd.f32 %v312, %v418
        %v420 = vpop.f32.mrb[0].mxu0
        %v421 = vadd.f32 %v316, %v420
        %v422 = vpop.f32.mrb[0].mxu0
        %v423 = vadd.f32 %v312, %v422
        %v424 = vpop.f32.mrb[0].mxu0
        %v425 = vadd.f32 %v316, %v424
        %426 = vmatprep.mubr.bf16.mxu0 0
        %427 = vmatmul.mubr.bf16.gmra.mrb[0].mxu0 %v343
        %v428 = vpop.f32.mrb[0].mxu0
        %v429 = vadd.f32 %v312, %v428
        %v430 = vpop.f32.mrb[0].mxu0
        %v431 = vadd.f32 %v316, %v430
        %v432 = vpop.f32.mrb[0].mxu0
        %v433 = vadd.f32 %v312, %v432
        %v434 = vpop.f32.mrb[0].mxu0
        %v435 = vadd.f32 %v316, %v434
        %436 = vmatprep.mubr.bf16.mxu0 0
        %437 = vmatmul.mubr.bf16.gmra.mrb[0].mxu0 %v346
        %v438 = vpop.f32.mrb[0].mxu0
        %v439 = vadd.f32 %v312, %v438
        %v440 = vpop.f32.mrb[0].mxu0
        %v441 = vadd.f32 %v316, %v440
        %v442 = vpop.f32.mrb[0].mxu0
        %v443 = vadd.f32 %v312, %v442
        %v444 = vpop.f32.mrb[0].mxu0
        %v445 = vadd.f32 %v316, %v444
        %446 = vmatprep.mubr.bf16.mxu0 0
        %447 = vmatmul.mubr.bf16.gmra.mrb[0].mxu0 %v349
        %v448 = vpop.f32.mrb[0].mxu0
        %v449 = vadd.f32 %v312, %v448
        %v450 = vpop.f32.mrb[0].mxu0
        %v451 = vadd.f32 %v316, %v450
        %v452 = vpop.f32.mrb[0].mxu0
        %v453 = vadd.f32 %v312, %v452
        %v454 = vpop.f32.mrb[0].mxu0
        %v455 = vadd.f32 %v316, %v454
        %456 = vmatprep.mubr.bf16.mxu0 0
        %457 = vmatmul.mubr.bf16.gmra.mrb[0].mxu0 %v352
        %v458 = vpop.f32.mrb[0].mxu0
        %v459 = vadd.f32 %v312, %v458
        %v460 = vpop.f32.mrb[0].mxu0
        %v461 = vadd.f32 %v316, %v460
        %v462 = vpop.f32.mrb[0].mxu0
        %v463 = vadd.f32 %v312, %v462
        %v464 = vpop.f32.mrb[0].mxu0
        %v465 = vadd.f32 %v316, %v464
        %466 = vdwg.mxu0
        %v467 = vpack.c.bf16 %v393, %v389
        %v468 = vpack.c.bf16 %v395, %v391
        %v469 = vpack.c.bf16 %v403, %v399
        %v470 = vpack.c.bf16 %v405, %v401
        %v471 = vpack.c.bf16 %v413, %v409
        %v472 = vpack.c.bf16 %v415, %v411
        %v473 = vpack.c.bf16 %v423, %v419
        %v474 = vpack.c.bf16 %v425, %v421
        %v475 = vpack.c.bf16 %v433, %v429
        %v476 = vpack.c.bf16 %v435, %v431
        %v477 = vpack.c.bf16 %v443, %v439
        %v478 = vpack.c.bf16 %v445, %v441
        %v479 = vpack.c.bf16 %v453, %v449
        %v480 = vpack.c.bf16 %v455, %v451
        %v481 = vpack.c.bf16 %v463, %v459
        %v482 = vpack.c.bf16 %v465, %v461
        %v483 = vmax.bf16 %v467, 0
        %v484 = vmax.bf16 %v468, 0
        %v485 = vmax.bf16 %v469, 0
        %v486 = vmax.bf16 %v470, 0
        %v487 = vmax.bf16 %v471, 0
        %v488 = vmax.bf16 %v472, 0
        %v489 = vmax.bf16 %v473, 0
        %v490 = vmax.bf16 %v474, 0
        %v491 = vmax.bf16 %v475, 0
        %v492 = vmax.bf16 %v476, 0
        %v493 = vmax.bf16 %v477, 0
        %v494 = vmax.bf16 %v478, 0
        %v495 = vmax.bf16 %v479, 0
        %v496 = vmax.bf16 %v480, 0
        %v497 = vmax.bf16 %v481, 0
        %v498 = vmax.bf16 %v482, 0
        %v499 = vld [vmem:[%s3] sm:$0xf]
        %v500 = vld [vmem:[%s3 + $0x4] sm:$0xf]
        %v501 = vld [vmem:[%s3 + $0x8] sm:$0xf]
        %v502 = vld [vmem:[%s3 + $0xc] sm:$0xf]
        %v503 = vld [vmem:[%s3 + $0x10] sm:$0xf]
        %v504 = vld [vmem:[%s3 + $0x14] sm:$0xf]
        %v505 = vld [vmem:[%s3 + $0x18] sm:$0xf]
        %v506 = vld [vmem:[%s3 + $0x1c] sm:$0xf]
        %v507 = vld [vmem:[%s3 + $0x20] sm:$0xf]
        %v508 = vld [vmem:[%s3 + $0x24] sm:$0xf]
        %v509 = vld [vmem:[%s3 + $0x28] sm:$0xf]
        %v510 = vld [vmem:[%s3 + $0x2c] sm:$0xf]
        %v511 = vld [vmem:[%s3 + $0x30] sm:$0xf]
        %v512 = vld [vmem:[%s3 + $0x34] sm:$0xf]
        %v513 = vld [vmem:[%s3 + $0x38] sm:$0xf]
        %v514 = vld [vmem:[%s3 + $0x3c] sm:$0xf]
        %v515 = vld [vmem:[%s3 + $0x40] sm:$0xf]
        %v516 = vld [vmem:[%s3 + $0x44] sm:$0xf]
        %v517 = vld [vmem:[%s3 + $0x48] sm:$0xf]
        %v518 = vld [vmem:[%s3 + $0x4c] sm:$0xf]
        %v519 = vld [vmem:[%s3 + $0x50] sm:$0xf]
        %v520 = vld [vmem:[%s3 + $0x54] sm:$0xf]
        %v521 = vld [vmem:[%s3 + $0x58] sm:$0xf]
        %v522 = vld [vmem:[%s3 + $0x5c] sm:$0xf]
        %v523 = vld [vmem:[%s3 + $0x60] sm:$0xf]
        %v524 = vld [vmem:[%s3 + $0x64] sm:$0xf]
        %v525 = vld [vmem:[%s3 + $0x68] sm:$0xf]
        %v526 = vld [vmem:[%s3 + $0x6c] sm:$0xf]
        %v527 = vld [vmem:[%s3 + $0x70] sm:$0xf]
        %v528 = vld [vmem:[%s3 + $0x74] sm:$0xf]
        %v529 = vld [vmem:[%s3 + $0x78] sm:$0xf]
        %v530 = vld [vmem:[%s3 + $0x7c] sm:$0xf]
        %v531 = vld [vmem:[%s4] sm:$0x1]
        %v533 = vlaneseq
        %v534 = vshrl.u32 %v533, 7
        %v535 = vsub.s32 0, %v534
        %v536 = vrot.slane %v531, %v535
        %v570 = vunpack.c.l.b16 %v499
        %v571 = vunpack.c.l.b16 %v500
        %v572 = vunpack.c.l.b16 %v501
        %v573 = vunpack.c.l.b16 %v502
        %v574 = vunpack.c.l.b16 %v503
        %v575 = vunpack.c.l.b16 %v504
        %v576 = vunpack.c.l.b16 %v505
        %v577 = vunpack.c.l.b16 %v506
        %v578 = vunpack.c.l.b16 %v507
        %v579 = vunpack.c.l.b16 %v508
        %v580 = vunpack.c.l.b16 %v509
        %v581 = vunpack.c.l.b16 %v510
        %v582 = vunpack.c.l.b16 %v511
        %v583 = vunpack.c.l.b16 %v512
        %v584 = vunpack.c.l.b16 %v513
        %v585 = vunpack.c.l.b16 %v514
        %v586 = vunpack.c.l.b16 %v515
        %v587 = vunpack.c.l.b16 %v516
        %v588 = vunpack.c.l.b16 %v517
        %v589 = vunpack.c.l.b16 %v518
        %v590 = vunpack.c.l.b16 %v519
        %v591 = vunpack.c.l.b16 %v520
        %v592 = vunpack.c.l.b16 %v521
        %v593 = vunpack.c.l.b16 %v522
        %v594 = vunpack.c.l.b16 %v523
        %v595 = vunpack.c.l.b16 %v524
        %v596 = vunpack.c.l.b16 %v525
        %v597 = vunpack.c.l.b16 %v526
        %v598 = vunpack.c.l.b16 %v527
        %v599 = vunpack.c.l.b16 %v528
        %v600 = vunpack.c.l.b16 %v529
        %v601 = vunpack.c.l.b16 %v530
        %v602 = vpack.c.b16 %v571, %v570
        %v603 = vpack.c.b16 %v573, %v572
        %v604 = vpack.c.b16 %v575, %v574
        %v605 = vpack.c.b16 %v577, %v576
        %v606 = vpack.c.b16 %v579, %v578
        %v607 = vpack.c.b16 %v581, %v580
        %v608 = vpack.c.b16 %v583, %v582
        %v609 = vpack.c.b16 %v585, %v584
        %v610 = vpack.c.b16 %v587, %v586
        %v611 = vpack.c.b16 %v589, %v588
        %v612 = vpack.c.b16 %v591, %v590
        %v613 = vpack.c.b16 %v593, %v592
        %v614 = vpack.c.b16 %v595, %v594
        %v615 = vpack.c.b16 %v597, %v596
        %v616 = vpack.c.b16 %v599, %v598
        %v617 = vpack.c.b16 %v601, %v600
        %634 = vmatprep.subr.bf16.mxu0 0
        %635 = vmatpush1.bf16.msra.mxu0 %v602
        %636 = vmatprep.subr.bf16.mxu0 0
        %637 = vmatpush1.bf16.msra.mxu0 %v603
        %638 = vmatprep.subr.bf16.mxu0 0
        %639 = vmatpush1.bf16.msra.mxu0 %v604
        %640 = vmatprep.subr.bf16.mxu0 0
        %641 = vmatpush1.bf16.msra.mxu0 %v605
        %642 = vmatprep.subr.bf16.mxu0 0
        %643 = vmatpush1.bf16.msra.mxu0 %v606
        %644 = vmatprep.subr.bf16.mxu0 0
        %645 = vmatpush1.bf16.msra.mxu0 %v607
        %646 = vmatprep.subr.bf16.mxu0 0
        %647 = vmatpush1.bf16.msra.mxu0 %v608
        %648 = vmatprep.subr.bf16.mxu0 0
        %649 = vmatpush1.bf16.msra.mxu0 %v609
        %650 = vmatprep.subr.bf16.mxu0 0
        %651 = vmatpush1.bf16.msra.mxu0 %v610
        %652 = vmatprep.subr.bf16.mxu0 0
        %653 = vmatpush1.bf16.msra.mxu0 %v611
        %654 = vmatprep.subr.bf16.mxu0 0
        %655 = vmatpush1.bf16.msra.mxu0 %v612
        %656 = vmatprep.subr.bf16.mxu0 0
        %657 = vmatpush1.bf16.msra.mxu0 %v613
        %658 = vmatprep.subr.bf16.mxu0 0
        %659 = vmatpush1.bf16.msra.mxu0 %v614
        %660 = vmatprep.subr.bf16.mxu0 0
        %661 = vmatpush1.bf16.msra.mxu0 %v615
        %662 = vmatprep.subr.bf16.mxu0 0
        %663 = vmatpush1.bf16.msra.mxu0 %v616
        %664 = vmatprep.subr.bf16.mxu0 0
        %665 = vmatpush1.bf16.msra.mxu0 %v617
        %666 = vmatprep.mubr.bf16.mxu0 %v484
        %667 = vmatmul.mubr.bf16.gmra.mrb[0].mxu0 %v483
        %v668 = vpop.f32.mrb[0].mxu0
        %v669 = vadd.f32 %v536, %v668
        %v670 = vpop.f32.mrb[0].mxu0
        %v671 = vpop.f32.mrb[0].mxu0
        %v672 = vadd.f32 %v536, %v671
        %v673 = vpop.f32.mrb[0].mxu0
        %674 = vmatprep.mubr.bf16.mxu0 %v486
        %675 = vmatmul.mubr.bf16.gmra.mrb[0].mxu0 %v485
        %v676 = vpop.f32.mrb[0].mxu0
        %v677 = vadd.f32 %v536, %v676
        %v678 = vpop.f32.mrb[0].mxu0
        %v679 = vpop.f32.mrb[0].mxu0
        %v680 = vadd.f32 %v536, %v679
        %v681 = vpop.f32.mrb[0].mxu0
        %682 = vmatprep.mubr.bf16.mxu0 %v488
        %683 = vmatmul.mubr.bf16.gmra.mrb[0].mxu0 %v487
        %v684 = vpop.f32.mrb[0].mxu0
        %v685 = vadd.f32 %v536, %v684
        %v686 = vpop.f32.mrb[0].mxu0
        %v687 = vpop.f32.mrb[0].mxu0
        %v688 = vadd.f32 %v536, %v687
        %v689 = vpop.f32.mrb[0].mxu0
        %690 = vmatprep.mubr.bf16.mxu0 %v490
        %691 = vmatmul.mubr.bf16.gmra.mrb[0].mxu0 %v489
        %v692 = vpop.f32.mrb[0].mxu0
        %v693 = vadd.f32 %v536, %v692
        %v694 = vpop.f32.mrb[0].mxu0
        %v695 = vpop.f32.mrb[0].mxu0
        %v696 = vadd.f32 %v536, %v695
        %v697 = vpop.f32.mrb[0].mxu0
        %698 = vmatprep.mubr.bf16.mxu0 %v492
        %699 = vmatmul.mubr.bf16.gmra.mrb[0].mxu0 %v491
        %v700 = vpop.f32.mrb[0].mxu0
        %v701 = vadd.f32 %v536, %v700
        %v702 = vpop.f32.mrb[0].mxu0
        %v703 = vpop.f32.mrb[0].mxu0
        %v704 = vadd.f32 %v536, %v703
        %v705 = vpop.f32.mrb[0].mxu0
        %706 = vmatprep.mubr.bf16.mxu0 %v494
        %707 = vmatmul.mubr.bf16.gmra.mrb[0].mxu0 %v493
        %v708 = vpop.f32.mrb[0].mxu0
        %v709 = vadd.f32 %v536, %v708
        %v710 = vpop.f32.mrb[0].mxu0
        %v711 = vpop.f32.mrb[0].mxu0
        %v712 = vadd.f32 %v536, %v711
        %v713 = vpop.f32.mrb[0].mxu0
        %714 = vmatprep.mubr.bf16.mxu0 %v496
        %715 = vmatmul.mubr.bf16.gmra.mrb[0].mxu0 %v495
        %v716 = vpop.f32.mrb[0].mxu0
        %v717 = vadd.f32 %v536, %v716
        %v718 = vpop.f32.mrb[0].mxu0
        %v719 = vpop.f32.mrb[0].mxu0
        %v720 = vadd.f32 %v536, %v719
        %v721 = vpop.f32.mrb[0].mxu0
        %722 = vmatprep.mubr.bf16.mxu0 %v498
        %723 = vmatmul.mubr.bf16.gmra.mrb[0].mxu0 %v497
        %v724 = vpop.f32.mrb[0].mxu0
        %v725 = vadd.f32 %v536, %v724
        %v726 = vpop.f32.mrb[0].mxu0
        %v727 = vpop.f32.mrb[0].mxu0
        %v728 = vadd.f32 %v536, %v727
        %v729 = vpop.f32.mrb[0].mxu0
        %730 = vdwg.mxu0
        %v731 = vpack.c.bf16 %v672, %v669
        %v732 = vpack.c.bf16 %v680, %v677
        %v733 = vpack.c.bf16 %v688, %v685
        %v734 = vpack.c.bf16 %v696, %v693
        %v735 = vpack.c.bf16 %v704, %v701
        %v736 = vpack.c.bf16 %v712, %v709
        %v737 = vpack.c.bf16 %v720, %v717
        %v738 = vpack.c.bf16 %v728, %v725
        %v739 = vmax.bf16 %v731, 0
        %v740 = vmax.bf16 %v732, 0
        %v741 = vmax.bf16 %v733, 0
        %v742 = vmax.bf16 %v734, 0
        %v743 = vmax.bf16 %v735, 0
        %v744 = vmax.bf16 %v736, 0
        %v745 = vmax.bf16 %v737, 0
        %v746 = vmax.bf16 %v738, 0
        %v747 = vld [vmem:[%s5] sm:$0xf]
        %v748 = vld [vmem:[%s5 + $0x4] sm:$0xf]
        %v749 = vld [vmem:[%s5 + $0x8] sm:$0xf]
        %v750 = vld [vmem:[%s5 + $0xc] sm:$0xf]
        %v751 = vld [vmem:[%s5 + $0x10] sm:$0xf]
        %v752 = vld [vmem:[%s5 + $0x14] sm:$0xf]
        %v753 = vld [vmem:[%s5 + $0x18] sm:$0xf]
        %v754 = vld [vmem:[%s5 + $0x1c] sm:$0xf]
        %v755 = vld [vmem:[%s5 + $0x20] sm:$0xf]
        %v756 = vld [vmem:[%s5 + $0x24] sm:$0xf]
        %v757 = vld [vmem:[%s5 + $0x28] sm:$0xf]
        %v758 = vld [vmem:[%s5 + $0x2c] sm:$0xf]
        %v759 = vld [vmem:[%s5 + $0x30] sm:$0xf]
        %v760 = vld [vmem:[%s5 + $0x34] sm:$0xf]
        %v761 = vld [vmem:[%s5 + $0x38] sm:$0xf]
        %v762 = vld [vmem:[%s5 + $0x3c] sm:$0xf]
        %v763 = vld [vmem:[%s6] sm:$0x1]
        %v765 = vlaneseq
        %v766 = vshrl.u32 %v765, 7
        %v767 = vsub.s32 0, %v766
        %v768 = vrot.slane %v763, %v767
        %v786 = vunpack.c.l.b16 %v747
        %v787 = vunpack.c.l.b16 %v748
        %v788 = vunpack.c.l.b16 %v749
        %v789 = vunpack.c.l.b16 %v750
        %v790 = vunpack.c.l.b16 %v751
        %v791 = vunpack.c.l.b16 %v752
        %v792 = vunpack.c.l.b16 %v753
        %v793 = vunpack.c.l.b16 %v754
        %v794 = vunpack.c.l.b16 %v755
        %v795 = vunpack.c.l.b16 %v756
        %v796 = vunpack.c.l.b16 %v757
        %v797 = vunpack.c.l.b16 %v758
        %v798 = vunpack.c.l.b16 %v759
        %v799 = vunpack.c.l.b16 %v760
        %v800 = vunpack.c.l.b16 %v761
        %v801 = vunpack.c.l.b16 %v762
        %v802 = vpack.c.b16 %v787, %v786
        %v803 = vpack.c.b16 %v789, %v788
        %v804 = vpack.c.b16 %v791, %v790
        %v805 = vpack.c.b16 %v793, %v792
        %v806 = vpack.c.b16 %v795, %v794
        %v807 = vpack.c.b16 %v797, %v796
        %v808 = vpack.c.b16 %v799, %v798
        %v809 = vpack.c.b16 %v801, %v800
        %818 = vmatprep.subr.bf16.mxu0 0
        %819 = vmatpush1.bf16.msra.mxu0 %v802
        %820 = vmatprep.subr.bf16.mxu0 0
        %821 = vmatpush1.bf16.msra.mxu0 %v803
        %822 = vmatprep.subr.bf16.mxu0 0
        %823 = vmatpush1.bf16.msra.mxu0 %v804
        %824 = vmatprep.subr.bf16.mxu0 0
        %825 = vmatpush1.bf16.msra.mxu0 %v805
        %826 = vmatprep.subr.bf16.mxu0 0
        %827 = vmatpush1.bf16.msra.mxu0 %v806
        %828 = vmatprep.subr.bf16.mxu0 0
        %829 = vmatpush1.bf16.msra.mxu0 %v807
        %830 = vmatprep.subr.bf16.mxu0 0
        %831 = vmatpush1.bf16.msra.mxu0 %v808
        %832 = vmatprep.subr.bf16.mxu0 0
        %833 = vmatpush1.bf16.msra.mxu0 %v809
        %834 = vmatprep.subr.bf16.mxu0 0
        %835 = vmatpush1.bf16.msra.mxu0 0
        %836 = vmatprep.subr.bf16.mxu0 0
        %837 = vmatpush1.bf16.msra.mxu0 0
        %838 = vmatprep.subr.bf16.mxu0 0
        %839 = vmatpush1.bf16.msra.mxu0 0
        %840 = vmatprep.subr.bf16.mxu0 0
        %841 = vmatpush1.bf16.msra.mxu0 0
        %842 = vmatprep.subr.bf16.mxu0 0
        %843 = vmatpush1.bf16.msra.mxu0 0
        %844 = vmatprep.subr.bf16.mxu0 0
        %845 = vmatpush1.bf16.msra.mxu0 0
        %846 = vmatprep.subr.bf16.mxu0 0
        %847 = vmatpush1.bf16.msra.mxu0 0
        %848 = vmatprep.subr.bf16.mxu0 0
        %849 = vmatpush1.bf16.msra.mxu0 0
        %850 = vmatprep.mubr.bf16.mxu0 0
        %851 = vmatmul.mubr.bf16.gmra.mrb[0].mxu0 %v739
        %v852 = vpop.f32.mrb[0].mxu0
        %v853 = vadd.f32 %v768, %v852
        %v854 = vpop.f32.mrb[0].mxu0
        %v855 = vpop.f32.mrb[0].mxu0
        %v856 = vadd.f32 %v768, %v855
        %v857 = vpop.f32.mrb[0].mxu0
        %858 = vmatprep.mubr.bf16.mxu0 0
        %859 = vmatmul.mubr.bf16.gmra.mrb[0].mxu0 %v740
        %v860 = vpop.f32.mrb[0].mxu0
        %v861 = vadd.f32 %v768, %v860
        %v862 = vpop.f32.mrb[0].mxu0
        %v863 = vpop.f32.mrb[0].mxu0
        %v864 = vadd.f32 %v768, %v863
        %v865 = vpop.f32.mrb[0].mxu0
        %866 = vmatprep.mubr.bf16.mxu0 0
        %867 = vmatmul.mubr.bf16.gmra.mrb[0].mxu0 %v741
        %v868 = vpop.f32.mrb[0].mxu0
        %v869 = vadd.f32 %v768, %v868
        %v870 = vpop.f32.mrb[0].mxu0
        %v871 = vpop.f32.mrb[0].mxu0
        %v872 = vadd.f32 %v768, %v871
        %v873 = vpop.f32.mrb[0].mxu0
        %874 = vmatprep.mubr.bf16.mxu0 0
        %875 = vmatmul.mubr.bf16.gmra.mrb[0].mxu0 %v742
        %v876 = vpop.f32.mrb[0].mxu0
        %v877 = vadd.f32 %v768, %v876
        %v878 = vpop.f32.mrb[0].mxu0
        %v879 = vpop.f32.mrb[0].mxu0
        %v880 = vadd.f32 %v768, %v879
        %v881 = vpop.f32.mrb[0].mxu0
        %882 = vmatprep.mubr.bf16.mxu0 0
        %883 = vmatmul.mubr.bf16.gmra.mrb[0].mxu0 %v743
        %v884 = vpop.f32.mrb[0].mxu0
        %v885 = vadd.f32 %v768, %v884
        %v886 = vpop.f32.mrb[0].mxu0
        %v887 = vpop.f32.mrb[0].mxu0
        %v888 = vadd.f32 %v768, %v887
        %v889 = vpop.f32.mrb[0].mxu0
        %890 = vmatprep.mubr.bf16.mxu0 0
        %891 = vmatmul.mubr.bf16.gmra.mrb[0].mxu0 %v744
        %v892 = vpop.f32.mrb[0].mxu0
        %v893 = vadd.f32 %v768, %v892
        %v894 = vpop.f32.mrb[0].mxu0
        %v895 = vpop.f32.mrb[0].mxu0
        %v896 = vadd.f32 %v768, %v895
        %v897 = vpop.f32.mrb[0].mxu0
        %898 = vmatprep.mubr.bf16.mxu0 0
        %899 = vmatmul.mubr.bf16.gmra.mrb[0].mxu0 %v745
        %v900 = vpop.f32.mrb[0].mxu0
        %v901 = vadd.f32 %v768, %v900
        %v902 = vpop.f32.mrb[0].mxu0
        %v903 = vpop.f32.mrb[0].mxu0
        %v904 = vadd.f32 %v768, %v903
        %v905 = vpop.f32.mrb[0].mxu0
        %906 = vmatprep.mubr.bf16.mxu0 0
        %907 = vmatmul.mubr.bf16.gmra.mrb[0].mxu0 %v746
        %v908 = vpop.f32.mrb[0].mxu0
        %v909 = vadd.f32 %v768, %v908
        %v910 = vpop.f32.mrb[0].mxu0
        %v911 = vpop.f32.mrb[0].mxu0
        %v912 = vadd.f32 %v768, %v911
        %v913 = vpop.f32.mrb[0].mxu0
        %914 = vdwg.mxu0
        %v915 = vpack.c.bf16 %v856, %v853
        %v916 = vpack.c.bf16 %v864, %v861
        %v917 = vpack.c.bf16 %v872, %v869
        %v918 = vpack.c.bf16 %v880, %v877
        %v919 = vpack.c.bf16 %v888, %v885
        %v920 = vpack.c.bf16 %v896, %v893
        %v921 = vpack.c.bf16 %v904, %v901
        %v922 = vpack.c.bf16 %v912, %v909
        %v931 = vunpack.c.l.b16 %v915
        %v932 = vunpack.c.h.b16 %v915
        %v933 = vunpack.c.l.b16 %v916
        %v934 = vunpack.c.h.b16 %v916
        %v935 = vunpack.c.l.b16 %v917
        %v936 = vunpack.c.h.b16 %v917
        %v937 = vunpack.c.l.b16 %v918
        %v938 = vunpack.c.h.b16 %v918
        %v939 = vunpack.c.l.b16 %v919
        %v940 = vunpack.c.h.b16 %v919
        %v941 = vunpack.c.l.b16 %v920
        %v942 = vunpack.c.h.b16 %v920
        %v943 = vunpack.c.l.b16 %v921
        %v944 = vunpack.c.h.b16 %v921
        %v945 = vunpack.c.l.b16 %v922
        %v946 = vunpack.c.h.b16 %v922
        %v947 = vpack.c.b16 %v931, %v931
        %v948 = vpack.c.b16 %v932, %v932
        %v949 = vpack.c.b16 %v933, %v933
        %v950 = vpack.c.b16 %v934, %v934
        %v951 = vpack.c.b16 %v935, %v935
        %v952 = vpack.c.b16 %v936, %v936
        %v953 = vpack.c.b16 %v937, %v937
        %v954 = vpack.c.b16 %v938, %v938
        %v955 = vpack.c.b16 %v939, %v939
        %v956 = vpack.c.b16 %v940, %v940
        %v957 = vpack.c.b16 %v941, %v941
        %v958 = vpack.c.b16 %v942, %v942
        %v959 = vpack.c.b16 %v943, %v943
        %v960 = vpack.c.b16 %v944, %v944
        %v961 = vpack.c.b16 %v945, %v945
        %v962 = vpack.c.b16 %v946, %v946
        %979 = vst [vmem:[%s272] sm:$0xf] %v947
        %980 = vst [vmem:[%s272 + $0x4] sm:$0xf] %v948
        %981 = vst [vmem:[%s272 + $0x8] sm:$0xf] %v949
        %982 = vst [vmem:[%s272 + $0xc] sm:$0xf] %v950
        %983 = vst [vmem:[%s272 + $0x10] sm:$0xf] %v951
        %984 = vst [vmem:[%s272 + $0x14] sm:$0xf] %v952
        %985 = vst [vmem:[%s272 + $0x18] sm:$0xf] %v953
        %986 = vst [vmem:[%s272 + $0x1c] sm:$0xf] %v954
        %987 = vst [vmem:[%s272 + $0x20] sm:$0xf] %v955
        %988 = vst [vmem:[%s272 + $0x24] sm:$0xf] %v956
        %989 = vst [vmem:[%s272 + $0x28] sm:$0xf] %v957
        %990 = vst [vmem:[%s272 + $0x2c] sm:$0xf] %v958
        %991 = vst [vmem:[%s272 + $0x30] sm:$0xf] %v959
        %992 = vst [vmem:[%s272 + $0x34] sm:$0xf] %v960
        %993 = vst [vmem:[%s272 + $0x38] sm:$0xf] %v961
        %994 = vst [vmem:[%s272 + $0x3c] sm:$0xf] %v962
        %s995 = sand.u32 %s181, 1
        %s996 = scalar_lea.sflag [#allocation3], %s995
        %s997 = sand.u32 %s181, 1
        %s998 = smul.addr %s997, 64
        %s999 = scalar_lea.vmem [#allocation2], %s998
        // Predicated region
        $region49: #{tpu_custom_call.1} parent=47 // pred_check
          %p1000 = pneg %p191
        $region50: #{tpu_custom_call.1} parent=47 // pred_check_branch
          %1002 = sbr.rel (%p1000) target = $region52
        $region51: #{tpu_custom_call.1} parent=47 // pred_region
          %s1003 = smul.u32 16, %s21
          %s1005 = ssub.s32 1024, 1024
          %1006 = vsyncadd %s996, %s1005
          %s1007 = smul.addr %s1003, 64
          %s1008 = scalar_lea.hbm %s7, %s1007
          %s1009 = sshll.u32 %s999, 4
          %s1010 = int_to_ptr.vmem [resolvable:$true] %s1009
          %1015 = dma.vmem_to_hbm [thread:$0]  %s1010, 1024, %s1008, %s996, 64, 64, 4
        $region52: #{tpu_custom_call.1} parent=47 // pred_fallthru
          _
      $region48: #{tpu_custom_call.1} parent=5 // pred_fallthru
        _
      %p1016 = scmp.le.s32.totalorder 2, %s16
      // Predicated region
      $region53: #{tpu_custom_call.1} parent=5 // pred_check
        %p1017 = pneg %p1016
      $region54: #{tpu_custom_call.1} parent=5 // pred_check_branch
        %1019 = sbr.rel (%p1017) target = $region56
      $region55: #{tpu_custom_call.1} parent=5 // pred_region
        %s1020 = ssub.s32 %s16, 2
        // Predicated region
        $region57: #{tpu_custom_call.1} parent=55 // pred_check
          %p1021 = pneg %p197
        $region58: #{tpu_custom_call.1} parent=55 // pred_check_branch
          %1023 = sbr.rel (%p1021) target = $region60
        $region59: #{tpu_custom_call.1} parent=55 // pred_region
          %s1024 = sand.u32 %s182, 1
          %s1025 = scalar_lea.sflag [#allocation3], %s1024
          %s1026 = sand.u32 %s182, 1
          %s1027 = smul.addr %s1026, 64
          %s1028 = scalar_lea.vmem [#allocation2], %s1027
          %1029 = dma.done %s1025, 1024
        $region60: #{tpu_custom_call.1} parent=55 // pred_fallthru
          _
      $region56: #{tpu_custom_call.1} parent=5 // pred_fallthru
        _
    $region6: #{tpu_custom_call.1} parent=1 // loop_footer
      %s20 = sadd.s32 1, %s16
    $region7: #{tpu_custom_call.1} parent=1 // loop_footer_branch
      %15 = sbr.rel target = $region3
    $region8: #{tpu_custom_call.1} parent=1 // loop_exit
      _
    %1030 = vsyncpa [#allocation3], 1
    %s1031 = scalar_lea.sflag [#allocation3], 1
    %1032 = vsyncpa %s1031, 1

</llo_original>
